<compile_context>
chip_gen: v7x
topology: tpu7x:2x2x1
jax: 0.10.0
libtpu: 0.0.40
codegen_flags: <defaults>
</compile_context>

<pallas_src>
import functools

import jax
import jax.numpy as jnp
from jax.experimental import pallas as pl
from jax.experimental.pallas import tpu as pltpu


def _round_up(n, m):
    return (n + m - 1) // m * m


def rnn_block_kernel(x_ref, wih_ref, whh_ref, b_ref, y_ref, h_ref, p_ref, *, time_block):
    """One grid step processes `time_block` consecutive time steps.

    x_ref:   (T, Bp, Dp) bf16  inputs for this time block (time-major)
    wih_ref: (Dp, Dp)    bf16  W_ih^T (resident across the grid)
    whh_ref: (Dp, Dp)    bf16  W_hh^T (resident across the grid)
    b_ref:   (1, Dp)     f32   fused bias (b_ih + b_hh)
    y_ref:   (T, Bp, Dp)       hidden-state outputs for this time block
    h_ref:   (Bp, Dp)    f32   VMEM carry of h_{t-1} across grid steps
    p_ref:   (T, Bp, Dp) f32   VMEM scratch for the hoisted input projection
    """
    blk = pl.program_id(0)

    @pl.when(blk == 0)
    def _():
        h_ref[...] = jnp.zeros_like(h_ref)

    T = time_block
    Bp, Dp = h_ref.shape

    # Hoisted input projection: ONE (T*Bp, Dp) x (Dp, Dp) bf16 GEMM for the
    # whole time block (fills the MXU), fused bias added in f32.  The result
    # lands in VMEM scratch so the serial loop below keeps only the h carry
    # live in vregs (no spills when time_block is large).
    x_blk = x_ref[...].reshape(T * Bp, Dp)                       # already bf16
    p = jnp.dot(x_blk, wih_ref[...], preferred_element_type=jnp.float32)
    p_ref[...] = (p + b_ref[...]).reshape(T, Bp, Dp)

    whh = whh_ref[...]                                           # bf16, loop-invariant

    def step(tau, h):
        h = jnp.tanh(
            p_ref[tau]
            + jnp.dot(h.astype(jnp.bfloat16), whh,
                      preferred_element_type=jnp.float32)
        )
        y_ref[tau] = h.astype(y_ref.dtype)
        return h

    # Visible, fully-unrolled serial recurrence: only h @ W_hh^T + tanh is on
    # the critical path.
    h_ref[...] = jax.lax.fori_loop(0, T, step, h_ref[...], unroll=True)


def vanilla_rnn_pallas(x, w_ih, w_hh, b_ih, b_hh, *, time_block=32):
    """Forward of VanillaRNN.

    x:          (B, D, L)  -- same layout the PyTorch module receives
    w_ih, w_hh: (D, D)     -- PyTorch nn.RNN weight_ih_l0 / weight_hh_l0
    b_ih, b_hh: (D,)
    returns (y, None) with y of shape (B, D, L)
    """
    B, D, L = x.shape
    out_dtype = x.dtype
    Bp = _round_up(B, 16)          # bf16 activations pack 16 sublanes / vreg
    Dp = _round_up(D, 128)         # lane-dense hidden dim (unmasked stores, full MXU)
    T = min(time_block, L)         # time steps per grid iteration
    Lp = _round_up(L, T)
    n_blocks = Lp // T

    # Time-major layout (the sequential time axis is the sole grid axis),
    # zero-padded, cast to bf16 (MXU operand dtype -> halves x DMA bytes).
    # Padded batch rows are independent (row-wise recurrence) and padded
    # hidden columns provably stay exactly 0 (zero weight cols + zero bias).
    # TODO(synk): for long L, fold this transpose/pad into the kernel
    #   (lane-dense (B, D, 128) loads + pltpu.einshape) to drop two extra
    #   full HBM passes over x and y.
    x_tm = jnp.transpose(x, (2, 0, 1))                                    # (L, B, D)
    x_tm = jnp.pad(x_tm, ((0, Lp - L), (0, Bp - B), (0, Dp - D))).astype(jnp.bfloat16)

    wih_t = jnp.pad(jnp.asarray(w_ih, jnp.float32).T,
                    ((0, Dp - D), (0, Dp - D))).astype(jnp.bfloat16)       # (Dp, Dp)
    whh_t = jnp.pad(jnp.asarray(w_hh, jnp.float32).T,
                    ((0, Dp - D), (0, Dp - D))).astype(jnp.bfloat16)       # (Dp, Dp)
    bias = jnp.pad(jnp.asarray(b_ih, jnp.float32) + jnp.asarray(b_hh, jnp.float32),
                   (0, Dp - D)).reshape(1, Dp)                             # (1, Dp) f32

    # Real VMEM footprint (+ headroom) instead of blanket 64 MiB (v7x has only
    # 64 MiB physical VMEM per TensorCore).
    y_item = jnp.dtype(out_dtype).itemsize
    footprint = (
        2 * T * Bp * Dp * 2          # x block, double-buffered, bf16
        + 2 * T * Bp * Dp * y_item   # y block, double-buffered
        + 2 * 2 * Dp * Dp * 2        # W_ih^T + W_hh^T (conservatively x2)
        + T * Bp * Dp * 4            # p scratch (f32)
        + Bp * Dp * 4                # h carry (f32)
        + 2 * 2 * Dp * 4             # bias
    )
    vmem_limit = int(min(max(footprint * 5 // 4 + (2 << 20), 16 << 20), 48 << 20))

    kernel = functools.partial(rnn_block_kernel, time_block=T)

    y_tm = pl.pallas_call(
        kernel,
        out_shape=jax.ShapeDtypeStruct((Lp, Bp, Dp), out_dtype),
        grid_spec=pltpu.PrefetchScalarGridSpec(
            num_scalar_prefetch=0,
            grid=(n_blocks,),
            in_specs=[
                pl.BlockSpec((T, Bp, Dp), lambda t: (t, 0, 0)),   # x time block
                pl.BlockSpec((Dp, Dp), lambda t: (0, 0)),         # W_ih^T (resident)
                pl.BlockSpec((Dp, Dp), lambda t: (0, 0)),         # W_hh^T (resident)
                pl.BlockSpec((1, Dp), lambda t: (0, 0)),          # fused bias
            ],
            out_specs=pl.BlockSpec((T, Bp, Dp), lambda t: (t, 0, 0)),
            scratch_shapes=[
                pltpu.VMEM((Bp, Dp), jnp.float32),     # hidden-state carry
                pltpu.VMEM((T, Bp, Dp), jnp.float32),  # hoisted projection
            ],
        ),
        compiler_params=pltpu.CompilerParams(
            dimension_semantics=("arbitrary",),        # time axis is a true recurrence
            vmem_limit_bytes=vmem_limit,
        ),
    )(x_tm, wih_t, whh_t, bias)

    y = jnp.transpose(y_tm[:L, :B, :D], (1, 2, 0))     # back to (B, D, L)
    # dropout=0.0 in VanillaRNN -> nn.Identity, nothing to do
    return y, None


def _reference_rnn(x, w_ih, w_hh, b_ih, b_hh):
    """Pure-JAX f32 reference (mirrors nn.RNN with tanh, batch_first, h0=0)."""
    B, D, L = x.shape
    xs = jnp.transpose(x, (2, 0, 1)).astype(jnp.float32)  # (L, B, D)

    def step(h, x_t):
        h_new = jnp.tanh(x_t @ w_ih.T + b_ih + h @ w_hh.T + b_hh)
        return h_new, h_new

    h0 = jnp.zeros((B, D), jnp.float32)
    _, ys = jax.lax.scan(step, h0, xs)
    return jnp.transpose(ys, (1, 2, 0)).astype(x.dtype)    # (B, D, L)


if __name__ == "__main__":
    B, D, L = 2, 32, 8   # batch, d_model, sequence length

    key = jax.random.PRNGKey(0)
    kx, k1, k2, k3, k4 = jax.random.split(key, 5)

    # deterministic parameter init, matching PyTorch nn.RNN default U(-1/sqrt(H), 1/sqrt(H))
    bound = 1.0 / jnp.sqrt(jnp.float32(D))
    x = jax.random.normal(kx, (B, D, L), jnp.float32)
    w_ih = jax.random.uniform(k1, (D, D), jnp.float32, -bound, bound)
    w_hh = jax.random.uniform(k2, (D, D), jnp.float32, -bound, bound)
    b_ih = jax.random.uniform(k3, (D,), jnp.float32, -bound, bound)
    b_hh = jax.random.uniform(k4, (D,), jnp.float32, -bound, bound)

    y, state = vanilla_rnn_pallas(x, w_ih, w_hh, b_ih, b_hh)
    y = jax.block_until_ready(y)

    y_ref = _reference_rnn(x, w_ih, w_hh, b_ih, b_hh)
    assert y.shape == (B, D, L)
    assert state is None
    # bf16 MXU operands (per perf guidance) -> compare against the f32
    # reference with a bf16-appropriate tolerance.
    max_err = float(jnp.max(jnp.abs(y - y_ref)))
    assert max_err < 5e-2, f"max abs error {max_err}"

    print("KERNEL_OK")
</pallas_src>

<mosaic_0001>
module attributes {stable_mosaic.version = 11 : i64} {
  func.func @rnn_block_kernel(%arg0: i32, %arg1: memref<8x16x128xbf16, #tpu.memory_space<vmem>>, %arg2: memref<128x128xbf16, #tpu.memory_space<vmem>>, %arg3: memref<128x128xbf16, #tpu.memory_space<vmem>>, %arg4: memref<1x128xf32, #tpu.memory_space<vmem>>, %arg5: memref<8x16x128xf32, #tpu.memory_space<vmem>>, %arg6: memref<16x128xf32, #tpu.memory_space<vmem>>, %arg7: memref<8x16x128xf32, #tpu.memory_space<vmem>>) attributes {dimension_semantics = [#tpu.dimension_semantics<arbitrary>], iteration_bounds = array<i64: 1>, scalar_prefetch = 0 : i64, scratch_operands = 2 : i64, tpu.core_type = #tpu.core_type<tc>, window_params = [{transform_indices = @transform_0, window_bounds = array<i64: 8, 16, 128>}, {pipeline_mode = #tpu.pipeline_mode<synchronous>, transform_indices = @transform_1, window_bounds = array<i64: 128, 128>}, {pipeline_mode = #tpu.pipeline_mode<synchronous>, transform_indices = @transform_2, window_bounds = array<i64: 128, 128>}, {pipeline_mode = #tpu.pipeline_mode<synchronous>, transform_indices = @transform_3, window_bounds = array<i64: 1, 128>}, {transform_indices = @transform_4, window_bounds = array<i64: 8, 16, 128>}]} {
    %c0_i32 = arith.constant 0 : i32
    %0 = arith.cmpi eq, %arg0, %c0_i32 : i32
    %1 = arith.extui %0 : i1 to i32
    %c0_i32_0 = arith.constant 0 : i32
    %2 = arith.cmpi ne, %1, %c0_i32_0 : i32
    scf.if %2 {
      %cst_57 = arith.constant 0.000000e+00 : f32
      %103 = vector.broadcast %cst_57 : f32 to vector<16x128xf32>
      %c0_58 = arith.constant 0 : index
      %c0_59 = arith.constant 0 : index
      %104 = vector.load %arg6[%c0_58, %c0_59] : memref<16x128xf32, #tpu.memory_space<vmem>>, vector<16x128xf32>
      tpu.vector_store %arg6[%c0_58, %c0_59], %103 {strides = array<i32>} : memref<16x128xf32, #tpu.memory_space<vmem>>, vector<16x128xf32>,
    } else {
    }
    %c0 = arith.constant 0 : index
    %c0_1 = arith.constant 0 : index
    %c0_2 = arith.constant 0 : index
    %3 = vector.load %arg1[%c0, %c0_1, %c0_2] : memref<8x16x128xbf16, #tpu.memory_space<vmem>>, vector<8x16x128xbf16>
    %4 = vector.shape_cast %3 : vector<8x16x128xbf16> to vector<128x128xbf16>
    %c0_3 = arith.constant 0 : index
    %c0_4 = arith.constant 0 : index
    %5 = vector.load %arg2[%c0_3, %c0_4] : memref<128x128xbf16, #tpu.memory_space<vmem>>, vector<128x128xbf16>
    %cst = arith.constant dense<0.000000e+00> : vector<128x128xf32>
    %6 = tpu.matmul %4, %5, %cst {dimension_numbers = #tpu.dot_dimension_numbers<[1], [0], [0], [1], [0, 0, 1, 1], [], []>} : vector<128x128xbf16>, vector<128x128xbf16>, vector<128x128xf32> -> vector<128x128xf32>
    %c0_5 = arith.constant 0 : index
    %c0_6 = arith.constant 0 : index
    %7 = vector.load %arg4[%c0_5, %c0_6] : memref<1x128xf32, #tpu.memory_space<vmem>>, vector<1x128xf32>
    %8 = vector.broadcast %7 : vector<1x128xf32> to vector<128x128xf32>
    %9 = arith.addf %6, %8 : vector<128x128xf32>
    %10 = vector.shape_cast %9 : vector<128x128xf32> to vector<8x16x128xf32>
    %c0_7 = arith.constant 0 : index
    %c0_8 = arith.constant 0 : index
    %c0_9 = arith.constant 0 : index
    %11 = vector.load %arg7[%c0_7, %c0_8, %c0_9] : memref<8x16x128xf32, #tpu.memory_space<vmem>>, vector<8x16x128xf32>
    tpu.vector_store %arg7[%c0_7, %c0_8, %c0_9], %10 {strides = array<i32>} : memref<8x16x128xf32, #tpu.memory_space<vmem>>, vector<8x16x128xf32>,
    %c0_10 = arith.constant 0 : index
    %c0_11 = arith.constant 0 : index
    %12 = vector.load %arg3[%c0_10, %c0_11] : memref<128x128xbf16, #tpu.memory_space<vmem>>, vector<128x128xbf16>
    %c0_12 = arith.constant 0 : index
    %c0_13 = arith.constant 0 : index
    %13 = vector.load %arg6[%c0_12, %c0_13] : memref<16x128xf32, #tpu.memory_space<vmem>>, vector<16x128xf32>
    %c0_i32_14 = arith.constant 0 : i32
    %14 = arith.index_cast %c0_i32_14 : i32 to index
    %c0_15 = arith.constant 0 : index
    %c0_16 = arith.constant 0 : index
    %15 = vector.load %arg7[%14, %c0_15, %c0_16] : memref<8x16x128xf32, #tpu.memory_space<vmem>>, vector<1x16x128xf32>
    %16 = vector.shape_cast %15 : vector<1x16x128xf32> to vector<16x128xf32>
    %17 = arith.truncf %13 : vector<16x128xf32> to vector<16x128xbf16>
    %cst_17 = arith.constant dense<0.000000e+00> : vector<16x128xf32>
    %18 = tpu.matmul %17, %12, %cst_17 {dimension_numbers = #tpu.dot_dimension_numbers<[1], [0], [0], [1], [0, 0, 1, 1], [], []>} : vector<16x128xbf16>, vector<128x128xbf16>, vector<16x128xf32> -> vector<16x128xf32>
    %19 = arith.addf %16, %18 : vector<16x128xf32>
    %20 = math.tanh %19 : vector<16x128xf32>
    %21 = arith.index_cast %c0_i32_14 : i32 to index
    %c0_18 = arith.constant 0 : index
    %c0_19 = arith.constant 0 : index
    %22 = vector.load %arg5[%21, %c0_18, %c0_19] : memref<8x16x128xf32, #tpu.memory_space<vmem>>, vector<1x16x128xf32>
    %23 = vector.shape_cast %22 : vector<1x16x128xf32> to vector<16x128xf32>
    %24 = vector.shape_cast %20 : vector<16x128xf32> to vector<1x16x128xf32>
    tpu.vector_store %arg5[%21, %c0_18, %c0_19], %24 {strides = array<i32>} : memref<8x16x128xf32, #tpu.memory_space<vmem>>, vector<1x16x128xf32>,
    %c1_i32 = arith.constant 1 : i32
    %25 = arith.index_cast %c1_i32 : i32 to index
    %c0_20 = arith.constant 0 : index
    %c0_21 = arith.constant 0 : index
    %26 = vector.load %arg7[%25, %c0_20, %c0_21] : memref<8x16x128xf32, #tpu.memory_space<vmem>>, vector<1x16x128xf32>
    %27 = vector.shape_cast %26 : vector<1x16x128xf32> to vector<16x128xf32>
    %28 = arith.truncf %20 : vector<16x128xf32> to vector<16x128xbf16>
    %cst_22 = arith.constant dense<0.000000e+00> : vector<16x128xf32>
    %29 = tpu.matmul %28, %12, %cst_22 {dimension_numbers = #tpu.dot_dimension_numbers<[1], [0], [0], [1], [0, 0, 1, 1], [], []>} : vector<16x128xbf16>, vector<128x128xbf16>, vector<16x128xf32> -> vector<16x128xf32>
    %30 = arith.addf %27, %29 : vector<16x128xf32>
    %31 = math.tanh %30 : vector<16x128xf32>
    %32 = arith.index_cast %c1_i32 : i32 to index
    %c0_23 = arith.constant 0 : index
    %c0_24 = arith.constant 0 : index
    %33 = vector.load %arg5[%32, %c0_23, %c0_24] : memref<8x16x128xf32, #tpu.memory_space<vmem>>, vector<1x16x128xf32>
    %34 = vector.shape_cast %33 : vector<1x16x128xf32> to vector<16x128xf32>
    %35 = vector.shape_cast %31 : vector<16x128xf32> to vector<1x16x128xf32>
    tpu.vector_store %arg5[%32, %c0_23, %c0_24], %35 {strides = array<i32>} : memref<8x16x128xf32, #tpu.memory_space<vmem>>, vector<1x16x128xf32>,
    %c2_i32 = arith.constant 2 : i32
    %36 = arith.index_cast %c2_i32 : i32 to index
    %c0_25 = arith.constant 0 : index
    %c0_26 = arith.constant 0 : index
    %37 = vector.load %arg7[%36, %c0_25, %c0_26] : memref<8x16x128xf32, #tpu.memory_space<vmem>>, vector<1x16x128xf32>
    %38 = vector.shape_cast %37 : vector<1x16x128xf32> to vector<16x128xf32>
    %39 = arith.truncf %31 : vector<16x128xf32> to vector<16x128xbf16>
    %cst_27 = arith.constant dense<0.000000e+00> : vector<16x128xf32>
    %40 = tpu.matmul %39, %12, %cst_27 {dimension_numbers = #tpu.dot_dimension_numbers<[1], [0], [0], [1], [0, 0, 1, 1], [], []>} : vector<16x128xbf16>, vector<128x128xbf16>, vector<16x128xf32> -> vector<16x128xf32>
    %41 = arith.addf %38, %40 : vector<16x128xf32>
    %42 = math.tanh %41 : vector<16x128xf32>
    %43 = arith.index_cast %c2_i32 : i32 to index
    %c0_28 = arith.constant 0 : index
    %c0_29 = arith.constant 0 : index
    %44 = vector.load %arg5[%43, %c0_28, %c0_29] : memref<8x16x128xf32, #tpu.memory_space<vmem>>, vector<1x16x128xf32>
    %45 = vector.shape_cast %44 : vector<1x16x128xf32> to vector<16x128xf32>
    %46 = vector.shape_cast %42 : vector<16x128xf32> to vector<1x16x128xf32>
    tpu.vector_store %arg5[%43, %c0_28, %c0_29], %46 {strides = array<i32>} : memref<8x16x128xf32, #tpu.memory_space<vmem>>, vector<1x16x128xf32>,
    %c3_i32 = arith.constant 3 : i32
    %47 = arith.index_cast %c3_i32 : i32 to index
    %c0_30 = arith.constant 0 : index
    %c0_31 = arith.constant 0 : index
    %48 = vector.load %arg7[%47, %c0_30, %c0_31] : memref<8x16x128xf32, #tpu.memory_space<vmem>>, vector<1x16x128xf32>
    %49 = vector.shape_cast %48 : vector<1x16x128xf32> to vector<16x128xf32>
    %50 = arith.truncf %42 : vector<16x128xf32> to vector<16x128xbf16>
    %cst_32 = arith.constant dense<0.000000e+00> : vector<16x128xf32>
    %51 = tpu.matmul %50, %12, %cst_32 {dimension_numbers = #tpu.dot_dimension_numbers<[1], [0], [0], [1], [0, 0, 1, 1], [], []>} : vector<16x128xbf16>, vector<128x128xbf16>, vector<16x128xf32> -> vector<16x128xf32>
    %52 = arith.addf %49, %51 : vector<16x128xf32>
    %53 = math.tanh %52 : vector<16x128xf32>
    %54 = arith.index_cast %c3_i32 : i32 to index
    %c0_33 = arith.constant 0 : index
    %c0_34 = arith.constant 0 : index
    %55 = vector.load %arg5[%54, %c0_33, %c0_34] : memref<8x16x128xf32, #tpu.memory_space<vmem>>, vector<1x16x128xf32>
    %56 = vector.shape_cast %55 : vector<1x16x128xf32> to vector<16x128xf32>
    %57 = vector.shape_cast %53 : vector<16x128xf32> to vector<1x16x128xf32>
    tpu.vector_store %arg5[%54, %c0_33, %c0_34], %57 {strides = array<i32>} : memref<8x16x128xf32, #tpu.memory_space<vmem>>, vector<1x16x128xf32>,
    %c4_i32 = arith.constant 4 : i32
    %58 = arith.index_cast %c4_i32 : i32 to index
    %c0_35 = arith.constant 0 : index
    %c0_36 = arith.constant 0 : index
    %59 = vector.load %arg7[%58, %c0_35, %c0_36] : memref<8x16x128xf32, #tpu.memory_space<vmem>>, vector<1x16x128xf32>
    %60 = vector.shape_cast %59 : vector<1x16x128xf32> to vector<16x128xf32>
    %61 = arith.truncf %53 : vector<16x128xf32> to vector<16x128xbf16>
    %cst_37 = arith.constant dense<0.000000e+00> : vector<16x128xf32>
    %62 = tpu.matmul %61, %12, %cst_37 {dimension_numbers = #tpu.dot_dimension_numbers<[1], [0], [0], [1], [0, 0, 1, 1], [], []>} : vector<16x128xbf16>, vector<128x128xbf16>, vector<16x128xf32> -> vector<16x128xf32>
    %63 = arith.addf %60, %62 : vector<16x128xf32>
    %64 = math.tanh %63 : vector<16x128xf32>
    %65 = arith.index_cast %c4_i32 : i32 to index
    %c0_38 = arith.constant 0 : index
    %c0_39 = arith.constant 0 : index
    %66 = vector.load %arg5[%65, %c0_38, %c0_39] : memref<8x16x128xf32, #tpu.memory_space<vmem>>, vector<1x16x128xf32>
    %67 = vector.shape_cast %66 : vector<1x16x128xf32> to vector<16x128xf32>
    %68 = vector.shape_cast %64 : vector<16x128xf32> to vector<1x16x128xf32>
    tpu.vector_store %arg5[%65, %c0_38, %c0_39], %68 {strides = array<i32>} : memref<8x16x128xf32, #tpu.memory_space<vmem>>, vector<1x16x128xf32>,
    %c5_i32 = arith.constant 5 : i32
    %69 = arith.index_cast %c5_i32 : i32 to index
    %c0_40 = arith.constant 0 : index
    %c0_41 = arith.constant 0 : index
    %70 = vector.load %arg7[%69, %c0_40, %c0_41] : memref<8x16x128xf32, #tpu.memory_space<vmem>>, vector<1x16x128xf32>
    %71 = vector.shape_cast %70 : vector<1x16x128xf32> to vector<16x128xf32>
    %72 = arith.truncf %64 : vector<16x128xf32> to vector<16x128xbf16>
    %cst_42 = arith.constant dense<0.000000e+00> : vector<16x128xf32>
    %73 = tpu.matmul %72, %12, %cst_42 {dimension_numbers = #tpu.dot_dimension_numbers<[1], [0], [0], [1], [0, 0, 1, 1], [], []>} : vector<16x128xbf16>, vector<128x128xbf16>, vector<16x128xf32> -> vector<16x128xf32>
    %74 = arith.addf %71, %73 : vector<16x128xf32>
    %75 = math.tanh %74 : vector<16x128xf32>
    %76 = arith.index_cast %c5_i32 : i32 to index
    %c0_43 = arith.constant 0 : index
    %c0_44 = arith.constant 0 : index
    %77 = vector.load %arg5[%76, %c0_43, %c0_44] : memref<8x16x128xf32, #tpu.memory_space<vmem>>, vector<1x16x128xf32>
    %78 = vector.shape_cast %77 : vector<1x16x128xf32> to vector<16x128xf32>
    %79 = vector.shape_cast %75 : vector<16x128xf32> to vector<1x16x128xf32>
    tpu.vector_store %arg5[%76, %c0_43, %c0_44], %79 {strides = array<i32>} : memref<8x16x128xf32, #tpu.memory_space<vmem>>, vector<1x16x128xf32>,
    %c6_i32 = arith.constant 6 : i32
    %80 = arith.index_cast %c6_i32 : i32 to index
    %c0_45 = arith.constant 0 : index
    %c0_46 = arith.constant 0 : index
    %81 = vector.load %arg7[%80, %c0_45, %c0_46] : memref<8x16x128xf32, #tpu.memory_space<vmem>>, vector<1x16x128xf32>
    %82 = vector.shape_cast %81 : vector<1x16x128xf32> to vector<16x128xf32>
    %83 = arith.truncf %75 : vector<16x128xf32> to vector<16x128xbf16>
    %cst_47 = arith.constant dense<0.000000e+00> : vector<16x128xf32>
    %84 = tpu.matmul %83, %12, %cst_47 {dimension_numbers = #tpu.dot_dimension_numbers<[1], [0], [0], [1], [0, 0, 1, 1], [], []>} : vector<16x128xbf16>, vector<128x128xbf16>, vector<16x128xf32> -> vector<16x128xf32>
    %85 = arith.addf %82, %84 : vector<16x128xf32>
    %86 = math.tanh %85 : vector<16x128xf32>
    %87 = arith.index_cast %c6_i32 : i32 to index
    %c0_48 = arith.constant 0 : index
    %c0_49 = arith.constant 0 : index
    %88 = vector.load %arg5[%87, %c0_48, %c0_49] : memref<8x16x128xf32, #tpu.memory_space<vmem>>, vector<1x16x128xf32>
    %89 = vector.shape_cast %88 : vector<1x16x128xf32> to vector<16x128xf32>
    %90 = vector.shape_cast %86 : vector<16x128xf32> to vector<1x16x128xf32>
    tpu.vector_store %arg5[%87, %c0_48, %c0_49], %90 {strides = array<i32>} : memref<8x16x128xf32, #tpu.memory_space<vmem>>, vector<1x16x128xf32>,
    %c7_i32 = arith.constant 7 : i32
    %91 = arith.index_cast %c7_i32 : i32 to index
    %c0_50 = arith.constant 0 : index
    %c0_51 = arith.constant 0 : index
    %92 = vector.load %arg7[%91, %c0_50, %c0_51] : memref<8x16x128xf32, #tpu.memory_space<vmem>>, vector<1x16x128xf32>
    %93 = vector.shape_cast %92 : vector<1x16x128xf32> to vector<16x128xf32>
    %94 = arith.truncf %86 : vector<16x128xf32> to vector<16x128xbf16>
    %cst_52 = arith.constant dense<0.000000e+00> : vector<16x128xf32>
    %95 = tpu.matmul %94, %12, %cst_52 {dimension_numbers = #tpu.dot_dimension_numbers<[1], [0], [0], [1], [0, 0, 1, 1], [], []>} : vector<16x128xbf16>, vector<128x128xbf16>, vector<16x128xf32> -> vector<16x128xf32>
    %96 = arith.addf %93, %95 : vector<16x128xf32>
    %97 = math.tanh %96 : vector<16x128xf32>
    %98 = arith.index_cast %c7_i32 : i32 to index
    %c0_53 = arith.constant 0 : index
    %c0_54 = arith.constant 0 : index
    %99 = vector.load %arg5[%98, %c0_53, %c0_54] : memref<8x16x128xf32, #tpu.memory_space<vmem>>, vector<1x16x128xf32>
    %100 = vector.shape_cast %99 : vector<1x16x128xf32> to vector<16x128xf32>
    %101 = vector.shape_cast %97 : vector<16x128xf32> to vector<1x16x128xf32>
    tpu.vector_store %arg5[%98, %c0_53, %c0_54], %101 {strides = array<i32>} : memref<8x16x128xf32, #tpu.memory_space<vmem>>, vector<1x16x128xf32>,
    %c8_i32 = arith.constant 8 : i32
    %c0_55 = arith.constant 0 : index
    %c0_56 = arith.constant 0 : index
    %102 = vector.load %arg6[%c0_55, %c0_56] : memref<16x128xf32, #tpu.memory_space<vmem>>, vector<16x128xf32>
    tpu.vector_store %arg6[%c0_55, %c0_56], %97 {strides = array<i32>} : memref<16x128xf32, #tpu.memory_space<vmem>>, vector<16x128xf32>,
    return
  }
  func.func @transform_0(%arg0: i32) -> (i32, i32, i32) {
    %c0_i32 = arith.constant 0 : i32
    %c0_i32_0 = arith.constant 0 : i32
    %c0_i32_1 = arith.constant 0 : i32
    return %arg0, %c0_i32, %c0_i32_0 : i32, i32, i32
  }
  func.func @transform_1(%arg0: i32) -> (i32, i32) {
    %c0_i32 = arith.constant 0 : i32
    %c0_i32_0 = arith.constant 0 : i32
    %c0_i32_1 = arith.constant 0 : i32
    return %c0_i32, %c0_i32_0 : i32, i32
  }
  func.func @transform_2(%arg0: i32) -> (i32, i32) {
    %c0_i32 = arith.constant 0 : i32
    %c0_i32_0 = arith.constant 0 : i32
    %c0_i32_1 = arith.constant 0 : i32
    return %c0_i32, %c0_i32_0 : i32, i32
  }
  func.func @transform_3(%arg0: i32) -> (i32, i32) {
    %c0_i32 = arith.constant 0 : i32
    %c0_i32_0 = arith.constant 0 : i32
    %c0_i32_1 = arith.constant 0 : i32
    return %c0_i32, %c0_i32_0 : i32, i32
  }
  func.func @transform_4(%arg0: i32) -> (i32, i32, i32) {
    %c0_i32 = arith.constant 0 : i32
    %c0_i32_0 = arith.constant 0 : i32
    %c0_i32_1 = arith.constant 0 : i32
    return %arg0, %c0_i32, %c0_i32_0 : i32, i32, i32
  }
}

</mosaic_0001>

<llo_original>
// kernel: tpu_custom_call.1
$region0: #{tpu_custom_call.1}
  #allocation0 [shape = 'u32[]', space=smem, size = 0x4, offset = 0x4, fixed_abs, tag = 'smem constant byte address 0x4 - core index']
  #allocation1 [shape = 'u32[144,128]{1,0:T(1,128)}', space=vmem, size = 0x12000, scoped, tag = 'internal scratch']
  #allocation2 [shape = 'f32[16,128]{1,0:T(8,128)}', space=vmem, size = 0x2000, scoped, tag = 'scratch operand']
  #allocation3 [shape = 'f32[8,16,128]{2,1,0:T(8,128)}', space=vmem, size = 0x10000, scoped, tag = 'scratch operand']
  %s0 = inlined_call_operand.hbm [shape: bf16[8,16,128], index: 0, kind: input, shape index: {}]
  %s1 = inlined_call_operand.hbm [shape: bf16[128,128], index: 1, kind: input, shape index: {}]
  %s2 = inlined_call_operand.hbm [shape: bf16[128,128], index: 2, kind: input, shape index: {}]
  %s3 = inlined_call_operand.vmem [shape: f32[1,128], index: 3, kind: input, shape index: {}]
  %s4 = inlined_call_operand.hbm [shape: f32[8,16,128], index: 4, kind: output, shape index: {}]
  %s5 = sld [smem:[#allocation0]]
  $region42: #{tpu_custom_call.1} parent=0
    _
  %s7 = ssub.s32 1, %s5
  %s8 = scalar_select 0, %s7, %s5
  $region1: #{tpu_custom_call.1} parent=0
    #allocation4 [shape = 'u8[32768]{0}', space=vmem, size = 0x8000, scoped, tag = 'input window, operand 0, single buffered']
    #allocation5 [shape = 's32[1]{0}', space=sflag, size = 0x4, scoped, tag = 'scoped memory for tpu_custom_call.1']
    #allocation6 [shape = 's32[1]{0}', space=sflag, size = 0x4, scoped, tag = 'scoped memory for tpu_custom_call.1']
    #allocation7 [shape = 'u8[32768]{0}', space=vmem, size = 0x8000, scoped, tag = 'input window, operand 1, single buffered']
    #allocation8 [shape = 's32[1]{0}', space=sflag, size = 0x4, scoped, tag = 'scoped memory for tpu_custom_call.1']
    #allocation9 [shape = 'u8[32768]{0}', space=vmem, size = 0x8000, scoped, tag = 'input window, operand 2, single buffered']
    #allocation10 [shape = 'u8[65536]{0}', space=vmem, size = 0x10000, scoped, tag = 'output window, operand 0, single buffered']
    %9 = vsyncpa [#allocation5], 0
    %10 = vsyncpa [#allocation8], 0
    %11 = vsyncpa [#allocation6], 0
    // Predicated region
    $region2: #{tpu_custom_call.1} parent=1 // pred_check
      _
    $region3: #{tpu_custom_call.1} parent=1 // pred_check_branch
      %13 = sbr.rel (0) target = $region5
    $region4: #{tpu_custom_call.1} parent=1 // pred_region
      %s15 = ssub.s32 1024, 1024
      %16 = vsyncadd [#allocation5], %s15
      %s17 = sshll.u32 [#allocation4], 4
      %s18 = int_to_ptr.vmem [resolvable:$true] %s17
      %23 = dma.hbm_to_vmem [thread:$0]  %s0, 1024, %s18, [#allocation5], 64, 64, 4
    $region5: #{tpu_custom_call.1} parent=1 // pred_fallthru
      _
    // Predicated region
    $region6: #{tpu_custom_call.1} parent=1 // pred_check
      _
    $region7: #{tpu_custom_call.1} parent=1 // pred_check_branch
      %25 = sbr.rel (0) target = $region9
    $region8: #{tpu_custom_call.1} parent=1 // pred_region
      %s27 = ssub.s32 1024, 1024
      %28 = vsyncadd [#allocation8], %s27
      %s29 = sshll.u32 [#allocation7], 4
      %s30 = int_to_ptr.vmem [resolvable:$true] %s29
      %35 = dma.hbm_to_vmem [thread:$0]  %s1, 1024, %s30, [#allocation8], 64, 64, 4
    $region9: #{tpu_custom_call.1} parent=1 // pred_fallthru
      _
    // Predicated region
    $region10: #{tpu_custom_call.1} parent=1 // pred_check
      _
    $region11: #{tpu_custom_call.1} parent=1 // pred_check_branch
      %37 = sbr.rel (0) target = $region13
    $region12: #{tpu_custom_call.1} parent=1 // pred_region
      %s39 = ssub.s32 1024, 1024
      %40 = vsyncadd [#allocation8], %s39
      %s41 = sshll.u32 [#allocation9], 4
      %s42 = int_to_ptr.vmem [resolvable:$true] %s41
      %47 = dma.hbm_to_vmem [thread:$0]  %s2, 1024, %s42, [#allocation8], 64, 64, 4
    $region13: #{tpu_custom_call.1} parent=1 // pred_fallthru
      _
    // Predicated region
    $region14: #{tpu_custom_call.1} parent=1 // pred_check
      _
    $region15: #{tpu_custom_call.1} parent=1 // pred_check_branch
      %49 = sbr.rel (0) target = $region17
    $region16: #{tpu_custom_call.1} parent=1 // pred_region
      _
    $region17: #{tpu_custom_call.1} parent=1 // pred_fallthru
      _
    // Predicated region
    $region18: #{tpu_custom_call.1} parent=1 // pred_check
      _
    $region19: #{tpu_custom_call.1} parent=1 // pred_check_branch
      %51 = sbr.rel (0) target = $region21
    $region20: #{tpu_custom_call.1} parent=1 // pred_region
      %52 = dma.done [#allocation5], 1024
    $region21: #{tpu_custom_call.1} parent=1 // pred_fallthru
      _
    // Predicated region
    $region22: #{tpu_custom_call.1} parent=1 // pred_check
      _
    $region23: #{tpu_custom_call.1} parent=1 // pred_check_branch
      %54 = sbr.rel (0) target = $region25
    $region24: #{tpu_custom_call.1} parent=1 // pred_region
      %55 = dma.done [#allocation8], 1024
    $region25: #{tpu_custom_call.1} parent=1 // pred_fallthru
      _
    // Predicated region
    $region26: #{tpu_custom_call.1} parent=1 // pred_check
      _
    $region27: #{tpu_custom_call.1} parent=1 // pred_check_branch
      %57 = sbr.rel (0) target = $region29
    $region28: #{tpu_custom_call.1} parent=1 // pred_region
      %58 = dma.done [#allocation8], 1024
    $region29: #{tpu_custom_call.1} parent=1 // pred_fallthru
      _
    %p60 = scmp.eq.s32.totalorder 0, 0
    // Predicated region
    $region30: #{tpu_custom_call.1} parent=1 // pred_check
      %p61 = pneg %p60
    $region31: #{tpu_custom_call.1} parent=1 // pred_check_branch
      %63 = sbr.rel (%p61) target = $region33
    $region32: #{tpu_custom_call.1} parent=1 // pred_region
      %64 = vst [vmem:[#allocation2] sm:$0xff] 0.0
      %65 = vst [vmem:[#allocation2 + $0x8] sm:$0xff] 0.0
    $region33: #{tpu_custom_call.1} parent=1 // pred_fallthru
      _
    %v66 = vld [vmem:[#allocation4] sm:$0xf]
    %v67 = vld [vmem:[#allocation4 + $0x4] sm:$0xf]
    %v68 = vld [vmem:[#allocation4 + $0x8] sm:$0xf]
    %v69 = vld [vmem:[#allocation4 + $0xc] sm:$0xf]
    %v70 = vld [vmem:[#allocation4 + $0x10] sm:$0xf]
    %v71 = vld [vmem:[#allocation4 + $0x14] sm:$0xf]
    %v72 = vld [vmem:[#allocation4 + $0x18] sm:$0xf]
    %v73 = vld [vmem:[#allocation4 + $0x1c] sm:$0xf]
    %v74 = vld [vmem:[#allocation4 + $0x20] sm:$0xf]
    %v75 = vld [vmem:[#allocation4 + $0x24] sm:$0xf]
    %v76 = vld [vmem:[#allocation4 + $0x28] sm:$0xf]
    %v77 = vld [vmem:[#allocation4 + $0x2c] sm:$0xf]
    %v78 = vld [vmem:[#allocation4 + $0x30] sm:$0xf]
    %v79 = vld [vmem:[#allocation4 + $0x34] sm:$0xf]
    %v80 = vld [vmem:[#allocation4 + $0x38] sm:$0xf]
    %v81 = vld [vmem:[#allocation4 + $0x3c] sm:$0xf]
    %v82 = vld [vmem:[#allocation7] sm:$0xf]
    %v83 = vld [vmem:[#allocation7 + $0x4] sm:$0xf]
    %v84 = vld [vmem:[#allocation7 + $0x8] sm:$0xf]
    %v85 = vld [vmem:[#allocation7 + $0xc] sm:$0xf]
    %v86 = vld [vmem:[#allocation7 + $0x10] sm:$0xf]
    %v87 = vld [vmem:[#allocation7 + $0x14] sm:$0xf]
    %v88 = vld [vmem:[#allocation7 + $0x18] sm:$0xf]
    %v89 = vld [vmem:[#allocation7 + $0x1c] sm:$0xf]
    %v90 = vld [vmem:[#allocation7 + $0x20] sm:$0xf]
    %v91 = vld [vmem:[#allocation7 + $0x24] sm:$0xf]
    %v92 = vld [vmem:[#allocation7 + $0x28] sm:$0xf]
    %v93 = vld [vmem:[#allocation7 + $0x2c] sm:$0xf]
    %v94 = vld [vmem:[#allocation7 + $0x30] sm:$0xf]
    %v95 = vld [vmem:[#allocation7 + $0x34] sm:$0xf]
    %v96 = vld [vmem:[#allocation7 + $0x38] sm:$0xf]
    %v97 = vld [vmem:[#allocation7 + $0x3c] sm:$0xf]
    %v98 = vld [vmem:[%s3] sm:$0x1]
    %v100 = vlaneseq
    %v101 = vshrl.u32 %v100, 7
    %v102 = vsub.s32 0, %v101
    %v103 = vrot.slane %v98, %v102
    %v121 = vunpack.c.l.b16 %v66
    %v122 = vunpack.c.l.b16 %v67
    %v123 = vunpack.c.l.b16 %v68
    %v124 = vunpack.c.l.b16 %v69
    %v125 = vunpack.c.l.b16 %v70
    %v126 = vunpack.c.l.b16 %v71
    %v127 = vunpack.c.l.b16 %v72
    %v128 = vunpack.c.l.b16 %v73
    %v129 = vunpack.c.l.b16 %v74
    %v130 = vunpack.c.l.b16 %v75
    %v131 = vunpack.c.l.b16 %v76
    %v132 = vunpack.c.l.b16 %v77
    %v133 = vunpack.c.l.b16 %v78
    %v134 = vunpack.c.l.b16 %v79
    %v135 = vunpack.c.l.b16 %v80
    %v136 = vunpack.c.l.b16 %v81
    %v137 = vpack.c.b16 %v122, %v121
    %v138 = vpack.c.b16 %v124, %v123
    %v139 = vpack.c.b16 %v126, %v125
    %v140 = vpack.c.b16 %v128, %v127
    %v141 = vpack.c.b16 %v130, %v129
    %v142 = vpack.c.b16 %v132, %v131
    %v143 = vpack.c.b16 %v134, %v133
    %v144 = vpack.c.b16 %v136, %v135
    %v169 = vunpack.c.l.b16 %v82
    %v170 = vunpack.c.l.b16 %v83
    %v171 = vunpack.c.l.b16 %v84
    %v172 = vunpack.c.l.b16 %v85
    %v173 = vunpack.c.l.b16 %v86
    %v174 = vunpack.c.l.b16 %v87
    %v175 = vunpack.c.l.b16 %v88
    %v176 = vunpack.c.l.b16 %v89
    %v177 = vunpack.c.l.b16 %v90
    %v178 = vunpack.c.l.b16 %v91
    %v179 = vunpack.c.l.b16 %v92
    %v180 = vunpack.c.l.b16 %v93
    %v181 = vunpack.c.l.b16 %v94
    %v182 = vunpack.c.l.b16 %v95
    %v183 = vunpack.c.l.b16 %v96
    %v184 = vunpack.c.l.b16 %v97
    %v185 = vpack.c.b16 %v170, %v169
    %v186 = vpack.c.b16 %v172, %v171
    %v187 = vpack.c.b16 %v174, %v173
    %v188 = vpack.c.b16 %v176, %v175
    %v189 = vpack.c.b16 %v178, %v177
    %v190 = vpack.c.b16 %v180, %v179
    %v191 = vpack.c.b16 %v182, %v181
    %v192 = vpack.c.b16 %v184, %v183
    %201 = vmatprep.subr.bf16.mxu0 0
    %202 = vmatpush1.bf16.msra.mxu0 %v185
    %203 = vmatprep.subr.bf16.mxu0 0
    %204 = vmatpush1.bf16.msra.mxu0 %v186
    %205 = vmatprep.subr.bf16.mxu0 0
    %206 = vmatpush1.bf16.msra.mxu0 %v187
    %207 = vmatprep.subr.bf16.mxu0 0
    %208 = vmatpush1.bf16.msra.mxu0 %v188
    %209 = vmatprep.subr.bf16.mxu0 0
    %210 = vmatpush1.bf16.msra.mxu0 %v189
    %211 = vmatprep.subr.bf16.mxu0 0
    %212 = vmatpush1.bf16.msra.mxu0 %v190
    %213 = vmatprep.subr.bf16.mxu0 0
    %214 = vmatpush1.bf16.msra.mxu0 %v191
    %215 = vmatprep.subr.bf16.mxu0 0
    %216 = vmatpush1.bf16.msra.mxu0 %v192
    %217 = vmatprep.subr.bf16.mxu0 0
    %218 = vmatpush1.bf16.msra.mxu0 0
    %219 = vmatprep.subr.bf16.mxu0 0
    %220 = vmatpush1.bf16.msra.mxu0 0
    %221 = vmatprep.subr.bf16.mxu0 0
    %222 = vmatpush1.bf16.msra.mxu0 0
    %223 = vmatprep.subr.bf16.mxu0 0
    %224 = vmatpush1.bf16.msra.mxu0 0
    %225 = vmatprep.subr.bf16.mxu0 0
    %226 = vmatpush1.bf16.msra.mxu0 0
    %227 = vmatprep.subr.bf16.mxu0 0
    %228 = vmatpush1.bf16.msra.mxu0 0
    %229 = vmatprep.subr.bf16.mxu0 0
    %230 = vmatpush1.bf16.msra.mxu0 0
    %231 = vmatprep.subr.bf16.mxu0 0
    %232 = vmatpush1.bf16.msra.mxu0 0
    %233 = vmatprep.mubr.bf16.mxu0 0
    %234 = vmatmul.mubr.bf16.gmra.mrb[0].mxu0 %v137
    %v235 = vpop.f32.mrb[0].mxu0
    %v236 = vadd.f32 %v103, %v235
    %v237 = vpop.f32.mrb[0].mxu0
    %v238 = vpop.f32.mrb[0].mxu0
    %v239 = vadd.f32 %v103, %v238
    %v240 = vpop.f32.mrb[0].mxu0
    %241 = vmatprep.mubr.bf16.mxu0 0
    %242 = vmatmul.mubr.bf16.gmra.mrb[0].mxu0 %v138
    %v243 = vpop.f32.mrb[0].mxu0
    %v244 = vadd.f32 %v103, %v243
    %v245 = vpop.f32.mrb[0].mxu0
    %v246 = vpop.f32.mrb[0].mxu0
    %v247 = vadd.f32 %v103, %v246
    %v248 = vpop.f32.mrb[0].mxu0
    %249 = vmatprep.mubr.bf16.mxu0 0
    %250 = vmatmul.mubr.bf16.gmra.mrb[0].mxu0 %v139
    %v251 = vpop.f32.mrb[0].mxu0
    %v252 = vadd.f32 %v103, %v251
    %v253 = vpop.f32.mrb[0].mxu0
    %v254 = vpop.f32.mrb[0].mxu0
    %v255 = vadd.f32 %v103, %v254
    %v256 = vpop.f32.mrb[0].mxu0
    %257 = vmatprep.mubr.bf16.mxu0 0
    %258 = vmatmul.mubr.bf16.gmra.mrb[0].mxu0 %v140
    %v259 = vpop.f32.mrb[0].mxu0
    %v260 = vadd.f32 %v103, %v259
    %v261 = vpop.f32.mrb[0].mxu0
    %v262 = vpop.f32.mrb[0].mxu0
    %v263 = vadd.f32 %v103, %v262
    %v264 = vpop.f32.mrb[0].mxu0
    %265 = vmatprep.mubr.bf16.mxu0 0
    %266 = vmatmul.mubr.bf16.gmra.mrb[0].mxu0 %v141
    %v267 = vpop.f32.mrb[0].mxu0
    %v268 = vadd.f32 %v103, %v267
    %v269 = vpop.f32.mrb[0].mxu0
    %v270 = vpop.f32.mrb[0].mxu0
    %v271 = vadd.f32 %v103, %v270
    %v272 = vpop.f32.mrb[0].mxu0
    %273 = vmatprep.mubr.bf16.mxu0 0
    %274 = vmatmul.mubr.bf16.gmra.mrb[0].mxu0 %v142
    %v275 = vpop.f32.mrb[0].mxu0
    %v276 = vadd.f32 %v103, %v275
    %v277 = vpop.f32.mrb[0].mxu0
    %v278 = vpop.f32.mrb[0].mxu0
    %v279 = vadd.f32 %v103, %v278
    %v280 = vpop.f32.mrb[0].mxu0
    %281 = vmatprep.mubr.bf16.mxu0 0
    %282 = vmatmul.mubr.bf16.gmra.mrb[0].mxu0 %v143
    %v283 = vpop.f32.mrb[0].mxu0
    %v284 = vadd.f32 %v103, %v283
    %v285 = vpop.f32.mrb[0].mxu0
    %v286 = vpop.f32.mrb[0].mxu0
    %v287 = vadd.f32 %v103, %v286
    %v288 = vpop.f32.mrb[0].mxu0
    %289 = vmatprep.mubr.bf16.mxu0 0
    %290 = vmatmul.mubr.bf16.gmra.mrb[0].mxu0 %v144
    %v291 = vpop.f32.mrb[0].mxu0
    %v292 = vadd.f32 %v103, %v291
    %v293 = vpop.f32.mrb[0].mxu0
    %v294 = vpop.f32.mrb[0].mxu0
    %v295 = vadd.f32 %v103, %v294
    %v296 = vpop.f32.mrb[0].mxu0
    %297 = vdwg.mxu0
    %298 = vst [vmem:[#allocation3] sm:$0xff] %v236
    %299 = vst [vmem:[#allocation3 + $0x8] sm:$0xff] %v239
    %300 = vst [vmem:[#allocation3 + $0x10] sm:$0xff] %v244
    %301 = vst [vmem:[#allocation3 + $0x18] sm:$0xff] %v247
    %302 = vst [vmem:[#allocation3 + $0x20] sm:$0xff] %v252
    %303 = vst [vmem:[#allocation3 + $0x28] sm:$0xff] %v255
    %304 = vst [vmem:[#allocation3 + $0x30] sm:$0xff] %v260
    %305 = vst [vmem:[#allocation3 + $0x38] sm:$0xff] %v263
    %306 = vst [vmem:[#allocation3 + $0x40] sm:$0xff] %v268
    %307 = vst [vmem:[#allocation3 + $0x48] sm:$0xff] %v271
    %308 = vst [vmem:[#allocation3 + $0x50] sm:$0xff] %v276
    %309 = vst [vmem:[#allocation3 + $0x58] sm:$0xff] %v279
    %310 = vst [vmem:[#allocation3 + $0x60] sm:$0xff] %v284
    %311 = vst [vmem:[#allocation3 + $0x68] sm:$0xff] %v287
    %312 = vst [vmem:[#allocation3 + $0x70] sm:$0xff] %v292
    %313 = vst [vmem:[#allocation3 + $0x78] sm:$0xff] %v295
    %v314 = vld [vmem:[#allocation9] sm:$0xf]
    %v315 = vld [vmem:[#allocation9 + $0x4] sm:$0xf]
    %v316 = vld [vmem:[#allocation9 + $0x8] sm:$0xf]
    %v317 = vld [vmem:[#allocation9 + $0xc] sm:$0xf]
    %v318 = vld [vmem:[#allocation9 + $0x10] sm:$0xf]
    %v319 = vld [vmem:[#allocation9 + $0x14] sm:$0xf]
    %v320 = vld [vmem:[#allocation9 + $0x18] sm:$0xf]
    %v321 = vld [vmem:[#allocation9 + $0x1c] sm:$0xf]
    %v322 = vld [vmem:[#allocation9 + $0x20] sm:$0xf]
    %v323 = vld [vmem:[#allocation9 + $0x24] sm:$0xf]
    %v324 = vld [vmem:[#allocation9 + $0x28] sm:$0xf]
    %v325 = vld [vmem:[#allocation9 + $0x2c] sm:$0xf]
    %v326 = vld [vmem:[#allocation9 + $0x30] sm:$0xf]
    %v327 = vld [vmem:[#allocation9 + $0x34] sm:$0xf]
    %v328 = vld [vmem:[#allocation9 + $0x38] sm:$0xf]
    %v329 = vld [vmem:[#allocation9 + $0x3c] sm:$0xf]
    %v330 = vld [vmem:[#allocation2] sm:$0xff]
    %v331 = vld [vmem:[#allocation2 + $0x8] sm:$0xff]
    %v332 = vld [vmem:[#allocation3] sm:$0xff]
    %v333 = vld [vmem:[#allocation3 + $0x8] sm:$0xff]
    %v334 = vpack.c.bf16 %v331, %v330
    %v351 = vunpack.c.l.b16 %v314
    %v352 = vunpack.c.l.b16 %v315
    %v353 = vunpack.c.l.b16 %v316
    %v354 = vunpack.c.l.b16 %v317
    %v355 = vunpack.c.l.b16 %v318
    %v356 = vunpack.c.l.b16 %v319
    %v357 = vunpack.c.l.b16 %v320
    %v358 = vunpack.c.l.b16 %v321
    %v359 = vunpack.c.l.b16 %v322
    %v360 = vunpack.c.l.b16 %v323
    %v361 = vunpack.c.l.b16 %v324
    %v362 = vunpack.c.l.b16 %v325
    %v363 = vunpack.c.l.b16 %v326
    %v364 = vunpack.c.l.b16 %v327
    %v365 = vunpack.c.l.b16 %v328
    %v366 = vunpack.c.l.b16 %v329
    %v367 = vpack.c.b16 %v352, %v351
    %v368 = vpack.c.b16 %v354, %v353
    %v369 = vpack.c.b16 %v356, %v355
    %v370 = vpack.c.b16 %v358, %v357
    %v371 = vpack.c.b16 %v360, %v359
    %v372 = vpack.c.b16 %v362, %v361
    %v373 = vpack.c.b16 %v364, %v363
    %v374 = vpack.c.b16 %v366, %v365
    %383 = vmatprep.subr.bf16.mxu0 0
    %384 = vmatpush1.bf16.msra.mxu0 %v367
    %385 = vmatprep.subr.bf16.mxu0 0
    %386 = vmatpush1.bf16.msra.mxu0 %v368
    %387 = vmatprep.subr.bf16.mxu0 0
    %388 = vmatpush1.bf16.msra.mxu0 %v369
    %389 = vmatprep.subr.bf16.mxu0 0
    %390 = vmatpush1.bf16.msra.mxu0 %v370
    %391 = vmatprep.subr.bf16.mxu0 0
    %392 = vmatpush1.bf16.msra.mxu0 %v371
    %393 = vmatprep.subr.bf16.mxu0 0
    %394 = vmatpush1.bf16.msra.mxu0 %v372
    %395 = vmatprep.subr.bf16.mxu0 0
    %396 = vmatpush1.bf16.msra.mxu0 %v373
    %397 = vmatprep.subr.bf16.mxu0 0
    %398 = vmatpush1.bf16.msra.mxu0 %v374
    %399 = vmatprep.subr.bf16.mxu0 0
    %400 = vmatpush1.bf16.msra.mxu0 0
    %401 = vmatprep.subr.bf16.mxu0 0
    %402 = vmatpush1.bf16.msra.mxu0 0
    %403 = vmatprep.subr.bf16.mxu0 0
    %404 = vmatpush1.bf16.msra.mxu0 0
    %405 = vmatprep.subr.bf16.mxu0 0
    %406 = vmatpush1.bf16.msra.mxu0 0
    %407 = vmatprep.subr.bf16.mxu0 0
    %408 = vmatpush1.bf16.msra.mxu0 0
    %409 = vmatprep.subr.bf16.mxu0 0
    %410 = vmatpush1.bf16.msra.mxu0 0
    %411 = vmatprep.subr.bf16.mxu0 0
    %412 = vmatpush1.bf16.msra.mxu0 0
    %413 = vmatprep.subr.bf16.mxu0 0
    %414 = vmatpush1.bf16.msra.mxu0 0
    %415 = vmatprep.mubr.bf16.mxu0 0
    %416 = vmatmul.mubr.bf16.gmra.mrb[0].mxu0 %v334
    %v417 = vpop.f32.mrb[0].mxu0
    %v418 = vadd.f32 0.0, %v417
    %v419 = vpop.f32.mrb[0].mxu0
    %v420 = vpop.f32.mrb[0].mxu0
    %v421 = vadd.f32 0.0, %v420
    %v422 = vpop.f32.mrb[0].mxu0
    %423 = vdwg.mxu0
    %v424 = vadd.f32 %v332, %v418
    %v425 = vadd.f32 %v333, %v421
    %v426 = vtanh.pop %v424
    %v427 = vtanh.pop %v425
    %428 = vst [vmem:[#allocation10] sm:$0xff] %v426
    %429 = vst [vmem:[#allocation10 + $0x8] sm:$0xff] %v427
    %s430 = scalar_lea.vmem [#allocation3], 16
    %v431 = vld [vmem:[%s430] sm:$0xff]
    %v432 = vld [vmem:[%s430 + $0x8] sm:$0xff]
    %v433 = vpack.c.bf16 %v427, %v426
    %434 = vmatprep.subr.bf16.mxu0 0
    %435 = vmatpush1.bf16.msra.mxu0 %v367
    %436 = vmatprep.subr.bf16.mxu0 0
    %437 = vmatpush1.bf16.msra.mxu0 %v368
    %438 = vmatprep.subr.bf16.mxu0 0
    %439 = vmatpush1.bf16.msra.mxu0 %v369
    %440 = vmatprep.subr.bf16.mxu0 0
    %441 = vmatpush1.bf16.msra.mxu0 %v370
    %442 = vmatprep.subr.bf16.mxu0 0
    %443 = vmatpush1.bf16.msra.mxu0 %v371
    %444 = vmatprep.subr.bf16.mxu0 0
    %445 = vmatpush1.bf16.msra.mxu0 %v372
    %446 = vmatprep.subr.bf16.mxu0 0
    %447 = vmatpush1.bf16.msra.mxu0 %v373
    %448 = vmatprep.subr.bf16.mxu0 0
    %449 = vmatpush1.bf16.msra.mxu0 %v374
    %450 = vmatprep.subr.bf16.mxu0 0
    %451 = vmatpush1.bf16.msra.mxu0 0
    %452 = vmatprep.subr.bf16.mxu0 0
    %453 = vmatpush1.bf16.msra.mxu0 0
    %454 = vmatprep.subr.bf16.mxu0 0
    %455 = vmatpush1.bf16.msra.mxu0 0
    %456 = vmatprep.subr.bf16.mxu0 0
    %457 = vmatpush1.bf16.msra.mxu0 0
    %458 = vmatprep.subr.bf16.mxu0 0
    %459 = vmatpush1.bf16.msra.mxu0 0
    %460 = vmatprep.subr.bf16.mxu0 0
    %461 = vmatpush1.bf16.msra.mxu0 0
    %462 = vmatprep.subr.bf16.mxu0 0
    %463 = vmatpush1.bf16.msra.mxu0 0
    %464 = vmatprep.subr.bf16.mxu0 0
    %465 = vmatpush1.bf16.msra.mxu0 0
    %466 = vmatprep.mubr.bf16.mxu0 0
    %467 = vmatmul.mubr.bf16.gmra.mrb[0].mxu0 %v433
    %v468 = vpop.f32.mrb[0].mxu0
    %v469 = vadd.f32 0.0, %v468
    %v470 = vpop.f32.mrb[0].mxu0
    %v471 = vpop.f32.mrb[0].mxu0
    %v472 = vadd.f32 0.0, %v471
    %v473 = vpop.f32.mrb[0].mxu0
    %474 = vdwg.mxu0
    %v475 = vadd.f32 %v431, %v469
    %v476 = vadd.f32 %v432, %v472
    %v477 = vtanh.pop %v475
    %v478 = vtanh.pop %v476
    %s479 = scalar_lea.vmem [#allocation10], 16
    %480 = vst [vmem:[%s479] sm:$0xff] %v477
    %481 = vst [vmem:[%s479 + $0x8] sm:$0xff] %v478
    %s482 = scalar_lea.vmem [#allocation3], 32
    %v483 = vld [vmem:[%s482] sm:$0xff]
    %v484 = vld [vmem:[%s482 + $0x8] sm:$0xff]
    %v485 = vpack.c.bf16 %v478, %v477
    %486 = vmatprep.subr.bf16.mxu0 0
    %487 = vmatpush1.bf16.msra.mxu0 %v367
    %488 = vmatprep.subr.bf16.mxu0 0
    %489 = vmatpush1.bf16.msra.mxu0 %v368
    %490 = vmatprep.subr.bf16.mxu0 0
    %491 = vmatpush1.bf16.msra.mxu0 %v369
    %492 = vmatprep.subr.bf16.mxu0 0
    %493 = vmatpush1.bf16.msra.mxu0 %v370
    %494 = vmatprep.subr.bf16.mxu0 0
    %495 = vmatpush1.bf16.msra.mxu0 %v371
    %496 = vmatprep.subr.bf16.mxu0 0
    %497 = vmatpush1.bf16.msra.mxu0 %v372
    %498 = vmatprep.subr.bf16.mxu0 0
    %499 = vmatpush1.bf16.msra.mxu0 %v373
    %500 = vmatprep.subr.bf16.mxu0 0
    %501 = vmatpush1.bf16.msra.mxu0 %v374
    %502 = vmatprep.subr.bf16.mxu0 0
    %503 = vmatpush1.bf16.msra.mxu0 0
    %504 = vmatprep.subr.bf16.mxu0 0
    %505 = vmatpush1.bf16.msra.mxu0 0
    %506 = vmatprep.subr.bf16.mxu0 0
    %507 = vmatpush1.bf16.msra.mxu0 0
    %508 = vmatprep.subr.bf16.mxu0 0
    %509 = vmatpush1.bf16.msra.mxu0 0
    %510 = vmatprep.subr.bf16.mxu0 0
    %511 = vmatpush1.bf16.msra.mxu0 0
    %512 = vmatprep.subr.bf16.mxu0 0
    %513 = vmatpush1.bf16.msra.mxu0 0
    %514 = vmatprep.subr.bf16.mxu0 0
    %515 = vmatpush1.bf16.msra.mxu0 0
    %516 = vmatprep.subr.bf16.mxu0 0
    %517 = vmatpush1.bf16.msra.mxu0 0
    %518 = vmatprep.mubr.bf16.mxu0 0
    %519 = vmatmul.mubr.bf16.gmra.mrb[0].mxu0 %v485
    %v520 = vpop.f32.mrb[0].mxu0
    %v521 = vadd.f32 0.0, %v520
    %v522 = vpop.f32.mrb[0].mxu0
    %v523 = vpop.f32.mrb[0].mxu0
    %v524 = vadd.f32 0.0, %v523
    %v525 = vpop.f32.mrb[0].mxu0
    %526 = vdwg.mxu0
    %v527 = vadd.f32 %v483, %v521
    %v528 = vadd.f32 %v484, %v524
    %v529 = vtanh.pop %v527
    %v530 = vtanh.pop %v528
    %s531 = scalar_lea.vmem [#allocation10], 32
    %532 = vst [vmem:[%s531] sm:$0xff] %v529
    %533 = vst [vmem:[%s531 + $0x8] sm:$0xff] %v530
    %s534 = scalar_lea.vmem [#allocation3], 48
    %v535 = vld [vmem:[%s534] sm:$0xff]
    %v536 = vld [vmem:[%s534 + $0x8] sm:$0xff]
    %v537 = vpack.c.bf16 %v530, %v529
    %538 = vmatprep.subr.bf16.mxu0 0
    %539 = vmatpush1.bf16.msra.mxu0 %v367
    %540 = vmatprep.subr.bf16.mxu0 0
    %541 = vmatpush1.bf16.msra.mxu0 %v368
    %542 = vmatprep.subr.bf16.mxu0 0
    %543 = vmatpush1.bf16.msra.mxu0 %v369
    %544 = vmatprep.subr.bf16.mxu0 0
    %545 = vmatpush1.bf16.msra.mxu0 %v370
    %546 = vmatprep.subr.bf16.mxu0 0
    %547 = vmatpush1.bf16.msra.mxu0 %v371
    %548 = vmatprep.subr.bf16.mxu0 0
    %549 = vmatpush1.bf16.msra.mxu0 %v372
    %550 = vmatprep.subr.bf16.mxu0 0
    %551 = vmatpush1.bf16.msra.mxu0 %v373
    %552 = vmatprep.subr.bf16.mxu0 0
    %553 = vmatpush1.bf16.msra.mxu0 %v374
    %554 = vmatprep.subr.bf16.mxu0 0
    %555 = vmatpush1.bf16.msra.mxu0 0
    %556 = vmatprep.subr.bf16.mxu0 0
    %557 = vmatpush1.bf16.msra.mxu0 0
    %558 = vmatprep.subr.bf16.mxu0 0
    %559 = vmatpush1.bf16.msra.mxu0 0
    %560 = vmatprep.subr.bf16.mxu0 0
    %561 = vmatpush1.bf16.msra.mxu0 0
    %562 = vmatprep.subr.bf16.mxu0 0
    %563 = vmatpush1.bf16.msra.mxu0 0
    %564 = vmatprep.subr.bf16.mxu0 0
    %565 = vmatpush1.bf16.msra.mxu0 0
    %566 = vmatprep.subr.bf16.mxu0 0
    %567 = vmatpush1.bf16.msra.mxu0 0
    %568 = vmatprep.subr.bf16.mxu0 0
    %569 = vmatpush1.bf16.msra.mxu0 0
    %570 = vmatprep.mubr.bf16.mxu0 0
    %571 = vmatmul.mubr.bf16.gmra.mrb[0].mxu0 %v537
    %v572 = vpop.f32.mrb[0].mxu0
    %v573 = vadd.f32 0.0, %v572
    %v574 = vpop.f32.mrb[0].mxu0
    %v575 = vpop.f32.mrb[0].mxu0
    %v576 = vadd.f32 0.0, %v575
    %v577 = vpop.f32.mrb[0].mxu0
    %578 = vdwg.mxu0
    %v579 = vadd.f32 %v535, %v573
    %v580 = vadd.f32 %v536, %v576
    %v581 = vtanh.pop %v579
    %v582 = vtanh.pop %v580
    %s583 = scalar_lea.vmem [#allocation10], 48
    %584 = vst [vmem:[%s583] sm:$0xff] %v581
    %585 = vst [vmem:[%s583 + $0x8] sm:$0xff] %v582
    %s586 = scalar_lea.vmem [#allocation3], 64
    %v587 = vld [vmem:[%s586] sm:$0xff]
    %v588 = vld [vmem:[%s586 + $0x8] sm:$0xff]
    %v589 = vpack.c.bf16 %v582, %v581
    %590 = vmatprep.subr.bf16.mxu0 0
    %591 = vmatpush1.bf16.msra.mxu0 %v367
    %592 = vmatprep.subr.bf16.mxu0 0
    %593 = vmatpush1.bf16.msra.mxu0 %v368
    %594 = vmatprep.subr.bf16.mxu0 0
    %595 = vmatpush1.bf16.msra.mxu0 %v369
    %596 = vmatprep.subr.bf16.mxu0 0
    %597 = vmatpush1.bf16.msra.mxu0 %v370
    %598 = vmatprep.subr.bf16.mxu0 0
    %599 = vmatpush1.bf16.msra.mxu0 %v371
    %600 = vmatprep.subr.bf16.mxu0 0
    %601 = vmatpush1.bf16.msra.mxu0 %v372
    %602 = vmatprep.subr.bf16.mxu0 0
    %603 = vmatpush1.bf16.msra.mxu0 %v373
    %604 = vmatprep.subr.bf16.mxu0 0
    %605 = vmatpush1.bf16.msra.mxu0 %v374
    %606 = vmatprep.subr.bf16.mxu0 0
    %607 = vmatpush1.bf16.msra.mxu0 0
    %608 = vmatprep.subr.bf16.mxu0 0
    %609 = vmatpush1.bf16.msra.mxu0 0
    %610 = vmatprep.subr.bf16.mxu0 0
    %611 = vmatpush1.bf16.msra.mxu0 0
    %612 = vmatprep.subr.bf16.mxu0 0
    %613 = vmatpush1.bf16.msra.mxu0 0
    %614 = vmatprep.subr.bf16.mxu0 0
    %615 = vmatpush1.bf16.msra.mxu0 0
    %616 = vmatprep.subr.bf16.mxu0 0
    %617 = vmatpush1.bf16.msra.mxu0 0
    %618 = vmatprep.subr.bf16.mxu0 0
    %619 = vmatpush1.bf16.msra.mxu0 0
    %620 = vmatprep.subr.bf16.mxu0 0
    %621 = vmatpush1.bf16.msra.mxu0 0
    %622 = vmatprep.mubr.bf16.mxu0 0
    %623 = vmatmul.mubr.bf16.gmra.mrb[0].mxu0 %v589
    %v624 = vpop.f32.mrb[0].mxu0
    %v625 = vadd.f32 0.0, %v624
    %v626 = vpop.f32.mrb[0].mxu0
    %v627 = vpop.f32.mrb[0].mxu0
    %v628 = vadd.f32 0.0, %v627
    %v629 = vpop.f32.mrb[0].mxu0
    %630 = vdwg.mxu0
    %v631 = vadd.f32 %v587, %v625
    %v632 = vadd.f32 %v588, %v628
    %v633 = vtanh.pop %v631
    %v634 = vtanh.pop %v632
    %s635 = scalar_lea.vmem [#allocation10], 64
    %636 = vst [vmem:[%s635] sm:$0xff] %v633
    %637 = vst [vmem:[%s635 + $0x8] sm:$0xff] %v634
    %s638 = scalar_lea.vmem [#allocation3], 80
    %v639 = vld [vmem:[%s638] sm:$0xff]
    %v640 = vld [vmem:[%s638 + $0x8] sm:$0xff]
    %v641 = vpack.c.bf16 %v634, %v633
    %642 = vmatprep.subr.bf16.mxu0 0
    %643 = vmatpush1.bf16.msra.mxu0 %v367
    %644 = vmatprep.subr.bf16.mxu0 0
    %645 = vmatpush1.bf16.msra.mxu0 %v368
    %646 = vmatprep.subr.bf16.mxu0 0
    %647 = vmatpush1.bf16.msra.mxu0 %v369
    %648 = vmatprep.subr.bf16.mxu0 0
    %649 = vmatpush1.bf16.msra.mxu0 %v370
    %650 = vmatprep.subr.bf16.mxu0 0
    %651 = vmatpush1.bf16.msra.mxu0 %v371
    %652 = vmatprep.subr.bf16.mxu0 0
    %653 = vmatpush1.bf16.msra.mxu0 %v372
    %654 = vmatprep.subr.bf16.mxu0 0
    %655 = vmatpush1.bf16.msra.mxu0 %v373
    %656 = vmatprep.subr.bf16.mxu0 0
    %657 = vmatpush1.bf16.msra.mxu0 %v374
    %658 = vmatprep.subr.bf16.mxu0 0
    %659 = vmatpush1.bf16.msra.mxu0 0
    %660 = vmatprep.subr.bf16.mxu0 0
    %661 = vmatpush1.bf16.msra.mxu0 0
    %662 = vmatprep.subr.bf16.mxu0 0
    %663 = vmatpush1.bf16.msra.mxu0 0
    %664 = vmatprep.subr.bf16.mxu0 0
    %665 = vmatpush1.bf16.msra.mxu0 0
    %666 = vmatprep.subr.bf16.mxu0 0
    %667 = vmatpush1.bf16.msra.mxu0 0
    %668 = vmatprep.subr.bf16.mxu0 0
    %669 = vmatpush1.bf16.msra.mxu0 0
    %670 = vmatprep.subr.bf16.mxu0 0
    %671 = vmatpush1.bf16.msra.mxu0 0
    %672 = vmatprep.subr.bf16.mxu0 0
    %673 = vmatpush1.bf16.msra.mxu0 0
    %674 = vmatprep.mubr.bf16.mxu0 0
    %675 = vmatmul.mubr.bf16.gmra.mrb[0].mxu0 %v641
    %v676 = vpop.f32.mrb[0].mxu0
    %v677 = vadd.f32 0.0, %v676
    %v678 = vpop.f32.mrb[0].mxu0
    %v679 = vpop.f32.mrb[0].mxu0
    %v680 = vadd.f32 0.0, %v679
    %v681 = vpop.f32.mrb[0].mxu0
    %682 = vdwg.mxu0
    %v683 = vadd.f32 %v639, %v677
    %v684 = vadd.f32 %v640, %v680
    %v685 = vtanh.pop %v683
    %v686 = vtanh.pop %v684
    %s687 = scalar_lea.vmem [#allocation10], 80
    %688 = vst [vmem:[%s687] sm:$0xff] %v685
    %689 = vst [vmem:[%s687 + $0x8] sm:$0xff] %v686
    %s690 = scalar_lea.vmem [#allocation3], 96
    %v691 = vld [vmem:[%s690] sm:$0xff]
    %v692 = vld [vmem:[%s690 + $0x8] sm:$0xff]
    %v693 = vpack.c.bf16 %v686, %v685
    %694 = vmatprep.subr.bf16.mxu0 0
    %695 = vmatpush1.bf16.msra.mxu0 %v367
    %696 = vmatprep.subr.bf16.mxu0 0
    %697 = vmatpush1.bf16.msra.mxu0 %v368
    %698 = vmatprep.subr.bf16.mxu0 0
    %699 = vmatpush1.bf16.msra.mxu0 %v369
    %700 = vmatprep.subr.bf16.mxu0 0
    %701 = vmatpush1.bf16.msra.mxu0 %v370
    %702 = vmatprep.subr.bf16.mxu0 0
    %703 = vmatpush1.bf16.msra.mxu0 %v371
    %704 = vmatprep.subr.bf16.mxu0 0
    %705 = vmatpush1.bf16.msra.mxu0 %v372
    %706 = vmatprep.subr.bf16.mxu0 0
    %707 = vmatpush1.bf16.msra.mxu0 %v373
    %708 = vmatprep.subr.bf16.mxu0 0
    %709 = vmatpush1.bf16.msra.mxu0 %v374
    %710 = vmatprep.subr.bf16.mxu0 0
    %711 = vmatpush1.bf16.msra.mxu0 0
    %712 = vmatprep.subr.bf16.mxu0 0
    %713 = vmatpush1.bf16.msra.mxu0 0
    %714 = vmatprep.subr.bf16.mxu0 0
    %715 = vmatpush1.bf16.msra.mxu0 0
    %716 = vmatprep.subr.bf16.mxu0 0
    %717 = vmatpush1.bf16.msra.mxu0 0
    %718 = vmatprep.subr.bf16.mxu0 0
    %719 = vmatpush1.bf16.msra.mxu0 0
    %720 = vmatprep.subr.bf16.mxu0 0
    %721 = vmatpush1.bf16.msra.mxu0 0
    %722 = vmatprep.subr.bf16.mxu0 0
    %723 = vmatpush1.bf16.msra.mxu0 0
    %724 = vmatprep.subr.bf16.mxu0 0
    %725 = vmatpush1.bf16.msra.mxu0 0
    %726 = vmatprep.mubr.bf16.mxu0 0
    %727 = vmatmul.mubr.bf16.gmra.mrb[0].mxu0 %v693
    %v728 = vpop.f32.mrb[0].mxu0
    %v729 = vadd.f32 0.0, %v728
    %v730 = vpop.f32.mrb[0].mxu0
    %v731 = vpop.f32.mrb[0].mxu0
    %v732 = vadd.f32 0.0, %v731
    %v733 = vpop.f32.mrb[0].mxu0
    %734 = vdwg.mxu0
    %v735 = vadd.f32 %v691, %v729
    %v736 = vadd.f32 %v692, %v732
    %v737 = vtanh.pop %v735
    %v738 = vtanh.pop %v736
    %s739 = scalar_lea.vmem [#allocation10], 96
    %740 = vst [vmem:[%s739] sm:$0xff] %v737
    %741 = vst [vmem:[%s739 + $0x8] sm:$0xff] %v738
    %s742 = scalar_lea.vmem [#allocation3], 112
    %v743 = vld [vmem:[%s742] sm:$0xff]
    %v744 = vld [vmem:[%s742 + $0x8] sm:$0xff]
    %v745 = vpack.c.bf16 %v738, %v737
    %746 = vmatprep.subr.bf16.mxu0 0
    %747 = vmatpush1.bf16.msra.mxu0 %v367
    %748 = vmatprep.subr.bf16.mxu0 0
    %749 = vmatpush1.bf16.msra.mxu0 %v368
    %750 = vmatprep.subr.bf16.mxu0 0
    %751 = vmatpush1.bf16.msra.mxu0 %v369
    %752 = vmatprep.subr.bf16.mxu0 0
    %753 = vmatpush1.bf16.msra.mxu0 %v370
    %754 = vmatprep.subr.bf16.mxu0 0
    %755 = vmatpush1.bf16.msra.mxu0 %v371
    %756 = vmatprep.subr.bf16.mxu0 0
    %757 = vmatpush1.bf16.msra.mxu0 %v372
    %758 = vmatprep.subr.bf16.mxu0 0
    %759 = vmatpush1.bf16.msra.mxu0 %v373
    %760 = vmatprep.subr.bf16.mxu0 0
    %761 = vmatpush1.bf16.msra.mxu0 %v374
    %762 = vmatprep.subr.bf16.mxu0 0
    %763 = vmatpush1.bf16.msra.mxu0 0
    %764 = vmatprep.subr.bf16.mxu0 0
    %765 = vmatpush1.bf16.msra.mxu0 0
    %766 = vmatprep.subr.bf16.mxu0 0
    %767 = vmatpush1.bf16.msra.mxu0 0
    %768 = vmatprep.subr.bf16.mxu0 0
    %769 = vmatpush1.bf16.msra.mxu0 0
    %770 = vmatprep.subr.bf16.mxu0 0
    %771 = vmatpush1.bf16.msra.mxu0 0
    %772 = vmatprep.subr.bf16.mxu0 0
    %773 = vmatpush1.bf16.msra.mxu0 0
    %774 = vmatprep.subr.bf16.mxu0 0
    %775 = vmatpush1.bf16.msra.mxu0 0
    %776 = vmatprep.subr.bf16.mxu0 0
    %777 = vmatpush1.bf16.msra.mxu0 0
    %778 = vmatprep.mubr.bf16.mxu0 0
    %779 = vmatmul.mubr.bf16.gmra.mrb[0].mxu0 %v745
    %v780 = vpop.f32.mrb[0].mxu0
    %v781 = vadd.f32 0.0, %v780
    %v782 = vpop.f32.mrb[0].mxu0
    %v783 = vpop.f32.mrb[0].mxu0
    %v784 = vadd.f32 0.0, %v783
    %v785 = vpop.f32.mrb[0].mxu0
    %786 = vdwg.mxu0
    %v787 = vadd.f32 %v743, %v781
    %v788 = vadd.f32 %v744, %v784
    %v789 = vtanh.pop %v787
    %v790 = vtanh.pop %v788
    %s791 = scalar_lea.vmem [#allocation10], 112
    %792 = vst [vmem:[%s791] sm:$0xff] %v789
    %793 = vst [vmem:[%s791 + $0x8] sm:$0xff] %v790
    %794 = vst [vmem:[#allocation2] sm:$0xff] %v789
    %795 = vst [vmem:[#allocation2 + $0x8] sm:$0xff] %v790
    // Predicated region
    $region34: #{tpu_custom_call.1} parent=1 // pred_check
      _
    $region35: #{tpu_custom_call.1} parent=1 // pred_check_branch
      %797 = sbr.rel (0) target = $region37
    $region36: #{tpu_custom_call.1} parent=1 // pred_region
      %s799 = ssub.s32 2048, 2048
      %800 = vsyncadd [#allocation6], %s799
      %s801 = sshll.u32 [#allocation10], 4
      %s802 = int_to_ptr.vmem [resolvable:$true] %s801
      %807 = dma.vmem_to_hbm [thread:$0]  %s802, 2048, %s4, [#allocation6], 128, 128, 8
    $region37: #{tpu_custom_call.1} parent=1 // pred_fallthru
      _
    // Predicated region
    $region38: #{tpu_custom_call.1} parent=1 // pred_check
      _
    $region39: #{tpu_custom_call.1} parent=1 // pred_check_branch
      %809 = sbr.rel (0) target = $region41
    $region40: #{tpu_custom_call.1} parent=1 // pred_region
      %810 = dma.done [#allocation6], 2048
    $region41: #{tpu_custom_call.1} parent=1 // pred_fallthru
      _
    %811 = vsyncpa [#allocation5], 1
    %812 = vsyncpa [#allocation8], 1
    %813 = vsyncpa [#allocation6], 1

</llo_original>
